<compile_context>
chip_gen: v5e
topology: v5e:2x2
jax: 0.10.0
libtpu: 0.0.40
codegen_flags: <defaults>
</compile_context>

<pallas_src>
import functools

import numpy as np
import jax
import jax.numpy as jnp
from jax.experimental import pallas as pl
from jax.experimental.pallas import tpu as pltpu

OUT_PAD = 8         # output lanes (n_actions padded up to 8; bump if n_actions > 8)
NEG_BIG = -1e30     # bias for padded action columns -> softmax weight == 0


def _round_up(n, m):
    return ((n + m - 1) // m) * m


def policy_kernel(x_ref, bt_ref, ph_ref, w1_ref, b1_ref, w2_ref, b2_ref,
                  w3_ref, b3_ref, out_ref):
    x = x_ref[...]                       # (TB, in_dim)        f32
    bt = bt_ref[...]                     # (in_dim, 2F)        f32, 2*pi folded, tiled [B.T, B.T]

    # Fourier projection on the VPU: in_dim (=2) broadcast FMAs, no MXU round-trip.
    # The phase row is [0,...,0, pi/2,...,pi/2] so sin(proj) == [sin(p), cos(p)].
    in_dim = x.shape[1]
    proj = ph_ref[...] + x[:, 0:1] * bt[0:1, :]
    for k in range(1, in_dim):
        proj = proj + x[:, k:k + 1] * bt[k:k + 1, :]           # (TB, 2F)
    phi = jnp.sin(proj)                                        # (TB, 2F) == [sin, cos]

    mxu_dtype = w1_ref.dtype             # weights pre-cast on the host (bf16 by default)

    def mm(a, w_ref):
        return jnp.dot(a.astype(mxu_dtype), w_ref[...],
                       preferred_element_type=jnp.float32)

    h1 = jnp.maximum(mm(phi, w1_ref) + b1_ref[...], 0.0)       # (TB, H)   f32
    h2 = jnp.maximum(mm(h1, w2_ref) + b2_ref[...], 0.0)        # (TB, H)   f32
    logits = mm(h2, w3_ref) + b3_ref[...]                      # (TB, OUT_PAD)

    # Numerically stable softmax; padded columns carry -1e30 bias -> exp == 0.
    m = jnp.max(logits, axis=-1, keepdims=True)
    e = jnp.exp(logits - m)
    denom = jnp.sum(e, axis=-1, keepdims=True)
    r = pl.reciprocal(denom, approx=True)                      # EUP vrcp
    r = r * (2.0 - denom * r)                                  # one Newton step -> ~exact 1/denom
    out_ref[...] = (e * r).astype(out_ref.dtype)


def prepare_kernel_params(B, w1, b1, w2, b2, w3, b3, *, mxu_dtype=jnp.bfloat16):
    """Convert PyTorch-layout params into the kernel layout.

    B : (fourier_dim, input_dim)          w1: (2*fourier_dim, hidden)   b1: (hidden,)
    w2: (hidden, hidden)   b2: (hidden,)  w3: (hidden, n_actions)       b3: (n_actions,)

    mxu_dtype applies to the matmul weights only; biases and the Fourier
    projection stay f32 and all matmuls accumulate in f32.
    """
    fourier_dim = B.shape[0]
    n_actions = w3.shape[1]
    assert n_actions <= OUT_PAD, "raise OUT_PAD for n_actions > 8"

    f32 = jnp.float32
    bt = (2.0 * np.pi) * jnp.asarray(B, f32).T                  # (in_dim, F), 2*pi folded in
    bt2 = jnp.concatenate([bt, bt], axis=1)                     # (in_dim, 2F)
    phase = jnp.concatenate(
        [jnp.zeros((1, fourier_dim), f32),
         jnp.full((1, fourier_dim), np.pi / 2.0, f32)], axis=1)  # (1, 2F)

    pad = OUT_PAD - n_actions
    w3p = jnp.pad(jnp.asarray(w3, f32), ((0, 0), (0, pad)))
    b3p = jnp.pad(jnp.asarray(b3, f32).reshape(1, -1), ((0, 0), (0, pad)),
                  constant_values=NEG_BIG)

    return (bt2.astype(f32), phase,
            jnp.asarray(w1, mxu_dtype), jnp.asarray(b1, f32).reshape(1, -1),
            jnp.asarray(w2, mxu_dtype), jnp.asarray(b2, f32).reshape(1, -1),
            w3p.astype(mxu_dtype), b3p.astype(f32))


def policy_forward(x, kernel_params, *, n_actions, block_batch=2048,
                   min_grid_steps=2):
    """x: (batch, input_dim) f32.  Returns (batch, n_actions) softmax probs (f32)."""
    bt2, phase, w1, b1, w2, b2, w3p, b3p = kernel_params
    batch, input_dim = x.shape
    two_f = bt2.shape[1]
    hidden = w2.shape[0]

    # Adaptive batch tiling: padding waste <= ~8 rows per step, and at least
    # `min_grid_steps` steps when the batch allows (v7x: 2 TensorCores shard the
    # "parallel" grid axis; v5e/v6e: harmless).
    steps = max(-(-batch // block_batch), 1)
    if steps < min_grid_steps and batch >= 8 * min_grid_steps:
        steps = min_grid_steps
    tb = _round_up(-(-batch // steps), 8)
    padded = tb * steps
    if padded != batch:
        x = jnp.pad(x, ((0, padded - batch), (0, 0)))
    grid = (steps,)

    const = lambda i: (0, 0)   # weights/biases stay VMEM-resident across the grid
    in_specs = [
        pl.BlockSpec((tb, input_dim), lambda i: (i, 0)),   # x tile (pipelined)
        pl.BlockSpec(bt2.shape, const),
        pl.BlockSpec(phase.shape, const),
        pl.BlockSpec(w1.shape, const),
        pl.BlockSpec(b1.shape, const),
        pl.BlockSpec(w2.shape, const),
        pl.BlockSpec(b2.shape, const),
        pl.BlockSpec(w3p.shape, const),
        pl.BlockSpec(b3p.shape, const),
    ]
    out_specs = pl.BlockSpec((tb, OUT_PAD), lambda i: (i, 0))

    flops = (2 * padded * (two_f * hidden + hidden * hidden + hidden * OUT_PAD)
             + 2 * padded * input_dim * two_f)
    transcendentals = padded * (two_f + OUT_PAD)
    weight_bytes = sum(int(np.prod(p.shape)) * p.dtype.itemsize for p in kernel_params)
    bytes_accessed = int(x.size) * 4 + weight_bytes + padded * OUT_PAD * 4

    out = pl.pallas_call(
        policy_kernel,
        out_shape=jax.ShapeDtypeStruct((padded, OUT_PAD), jnp.float32),
        grid_spec=pltpu.PrefetchScalarGridSpec(
            num_scalar_prefetch=0,
            grid=grid,
            in_specs=in_specs,
            out_specs=out_specs,
        ),
        compiler_params=pltpu.CompilerParams(
            dimension_semantics=("parallel",)),
        cost_estimate=pl.CostEstimate(flops=flops,
                                      transcendentals=transcendentals,
                                      bytes_accessed=bytes_accessed),
    )(x, bt2, phase, w1, b1, w2, b2, w3p, b3p)

    return out[:batch, :n_actions]


def init_params(key, input_dim=2, fourier_dim=32, hidden_dim=128, n_actions=4):
    """PyTorch-layout params: B (F,in); Linear weights stored as (in, out)."""
    ks = jax.random.split(key, 4)
    B = jax.random.normal(ks[0], (fourier_dim, input_dim), jnp.float32) * 10.0

    def linear(k, fan_in, fan_out):
        kw, kb = jax.random.split(k)
        bound = 1.0 / np.sqrt(fan_in)
        w = jax.random.uniform(kw, (fan_in, fan_out), jnp.float32, -bound, bound)
        b = jax.random.uniform(kb, (fan_out,), jnp.float32, -bound, bound)
        return w, b

    w1, b1 = linear(ks[1], 2 * fourier_dim, hidden_dim)
    w2, b2 = linear(ks[2], hidden_dim, hidden_dim)
    w3, b3 = linear(ks[3], hidden_dim, n_actions)
    return (B, w1, b1, w2, b2, w3, b3)


def reference_forward(x, params):
    B, w1, b1, w2, b2, w3, b3 = params
    hp = jax.lax.Precision.HIGHEST
    proj = 2.0 * np.pi * jnp.dot(x, B.T, precision=hp)
    phi = jnp.concatenate([jnp.sin(proj), jnp.cos(proj)], axis=-1)
    h1 = jnp.maximum(jnp.dot(phi, w1, precision=hp) + b1, 0.0)
    h2 = jnp.maximum(jnp.dot(h1, w2, precision=hp) + b2, 0.0)
    logits = jnp.dot(h2, w3, precision=hp) + b3
    return jax.nn.softmax(logits, axis=-1)


if __name__ == "__main__":
    key = jax.random.PRNGKey(0)
    kp, kx = jax.random.split(key)

    module_params = init_params(kp)                    # PyTorch-layout params
    batch, input_dim, n_actions = 8, 2, 4
    # CliffWalk-style (row, col) coordinates, normalized to [0, 1].
    x = jax.random.uniform(kx, (batch, input_dim), jnp.float32)

    ref = reference_forward(x, module_params)

    # Default path: bf16 MXU operands, f32 accumulation / softmax.
    kernel_params = prepare_kernel_params(*module_params)
    out = jax.block_until_ready(policy_forward(x, kernel_params, n_actions=n_actions))
    assert out.shape == (batch, n_actions)
    # bf16 matmul operands -> relaxed tolerance on the probabilities.
    np.testing.assert_allclose(np.asarray(out), np.asarray(ref), rtol=8e-2, atol=3e-2)
    np.testing.assert_allclose(np.asarray(out).sum(axis=-1), np.ones(batch),
                               rtol=1e-5, atol=1e-5)

    # Full-f32 MXU path: tight check of the kernel restructuring itself
    # (2*pi fold, sin(x+pi/2) fusion, padded-output softmax).
    kernel_params_f32 = prepare_kernel_params(*module_params, mxu_dtype=jnp.float32)
    out32 = jax.block_until_ready(policy_forward(x, kernel_params_f32,
                                                 n_actions=n_actions))
    np.testing.assert_allclose(np.asarray(out32), np.asarray(ref),
                               rtol=1e-3, atol=3e-4)
    np.testing.assert_allclose(np.asarray(out32).sum(axis=-1), np.ones(batch),
                               rtol=1e-5, atol=1e-5)

    print("KERNEL_OK")
</pallas_src>

<mosaic_0001>
module attributes {stable_mosaic.version = 11 : i64} {
  func.func @policy_kernel(%arg0: i32, %arg1: memref<8x2xf32, #tpu.memory_space<vmem>>, %arg2: memref<2x64xf32, #tpu.memory_space<vmem>>, %arg3: memref<1x64xf32, #tpu.memory_space<vmem>>, %arg4: memref<64x128xbf16, #tpu.memory_space<vmem>>, %arg5: memref<1x128xf32, #tpu.memory_space<vmem>>, %arg6: memref<128x128xbf16, #tpu.memory_space<vmem>>, %arg7: memref<1x128xf32, #tpu.memory_space<vmem>>, %arg8: memref<128x8xbf16, #tpu.memory_space<vmem>>, %arg9: memref<1x8xf32, #tpu.memory_space<vmem>>, %arg10: memref<8x8xf32, #tpu.memory_space<vmem>>) attributes {dimension_semantics = [#tpu.dimension_semantics<parallel>], iteration_bounds = array<i64: 1>, scalar_prefetch = 0 : i64, scratch_operands = 0 : i64, tpu.core_type = #tpu.core_type<tc>, window_params = [{transform_indices = @transform_0, window_bounds = array<i64: 8, 2>}, {pipeline_mode = #tpu.pipeline_mode<synchronous>, transform_indices = @transform_1, window_bounds = array<i64: 2, 64>}, {pipeline_mode = #tpu.pipeline_mode<synchronous>, transform_indices = @transform_2, window_bounds = array<i64: 1, 64>}, {pipeline_mode = #tpu.pipeline_mode<synchronous>, transform_indices = @transform_3, window_bounds = array<i64: 64, 128>}, {pipeline_mode = #tpu.pipeline_mode<synchronous>, transform_indices = @transform_4, window_bounds = array<i64: 1, 128>}, {pipeline_mode = #tpu.pipeline_mode<synchronous>, transform_indices = @transform_5, window_bounds = array<i64: 128, 128>}, {pipeline_mode = #tpu.pipeline_mode<synchronous>, transform_indices = @transform_6, window_bounds = array<i64: 1, 128>}, {pipeline_mode = #tpu.pipeline_mode<synchronous>, transform_indices = @transform_7, window_bounds = array<i64: 128, 8>}, {pipeline_mode = #tpu.pipeline_mode<synchronous>, transform_indices = @transform_8, window_bounds = array<i64: 1, 8>}, {transform_indices = @transform_9, window_bounds = array<i64: 8, 8>}]} {
    %c0 = arith.constant 0 : index
    %c0_0 = arith.constant 0 : index
    %0 = vector.load %arg1[%c0, %c0_0] : memref<8x2xf32, #tpu.memory_space<vmem>>, vector<8x2xf32>
    %c0_1 = arith.constant 0 : index
    %c0_2 = arith.constant 0 : index
    %1 = vector.load %arg2[%c0_1, %c0_2] : memref<2x64xf32, #tpu.memory_space<vmem>>, vector<2x64xf32>
    %c0_3 = arith.constant 0 : index
    %c0_4 = arith.constant 0 : index
    %2 = vector.load %arg3[%c0_3, %c0_4] : memref<1x64xf32, #tpu.memory_space<vmem>>, vector<1x64xf32>
    %3 = vector.extract_strided_slice %0 {offsets = [0, 0], sizes = [8, 1], strides = [1, 1]} : vector<8x2xf32> to vector<8x1xf32>
    %4 = vector.extract_strided_slice %1 {offsets = [0, 0], sizes = [1, 64], strides = [1, 1]} : vector<2x64xf32> to vector<1x64xf32>
    %5 = vector.broadcast %3 : vector<8x1xf32> to vector<8x64xf32>
    %6 = vector.broadcast %4 : vector<1x64xf32> to vector<8x64xf32>
    %7 = arith.mulf %5, %6 : vector<8x64xf32>
    %8 = vector.broadcast %2 : vector<1x64xf32> to vector<8x64xf32>
    %9 = arith.addf %8, %7 : vector<8x64xf32>
    %10 = vector.extract_strided_slice %0 {offsets = [0, 1], sizes = [8, 1], strides = [1, 1]} : vector<8x2xf32> to vector<8x1xf32>
    %11 = vector.extract_strided_slice %1 {offsets = [1, 0], sizes = [1, 64], strides = [1, 1]} : vector<2x64xf32> to vector<1x64xf32>
    %12 = vector.broadcast %10 : vector<8x1xf32> to vector<8x64xf32>
    %13 = vector.broadcast %11 : vector<1x64xf32> to vector<8x64xf32>
    %14 = arith.mulf %12, %13 : vector<8x64xf32>
    %15 = arith.addf %9, %14 : vector<8x64xf32>
    %16 = math.sin %15 : vector<8x64xf32>
    %17 = arith.truncf %16 : vector<8x64xf32> to vector<8x64xbf16>
    %c0_5 = arith.constant 0 : index
    %c0_6 = arith.constant 0 : index
    %18 = vector.load %arg4[%c0_5, %c0_6] : memref<64x128xbf16, #tpu.memory_space<vmem>>, vector<64x128xbf16>
    %cst = arith.constant dense<0.000000e+00> : vector<8x128xf32>
    %19 = tpu.matmul %17, %18, %cst {dimension_numbers = #tpu.dot_dimension_numbers<[1], [0], [0], [1], [0, 0, 1, 1], [], []>} : vector<8x64xbf16>, vector<64x128xbf16>, vector<8x128xf32> -> vector<8x128xf32>
    %c0_7 = arith.constant 0 : index
    %c0_8 = arith.constant 0 : index
    %20 = vector.load %arg5[%c0_7, %c0_8] : memref<1x128xf32, #tpu.memory_space<vmem>>, vector<1x128xf32>
    %21 = vector.broadcast %20 : vector<1x128xf32> to vector<8x128xf32>
    %22 = arith.addf %19, %21 : vector<8x128xf32>
    %cst_9 = arith.constant 0.000000e+00 : f32
    %23 = vector.broadcast %cst_9 : f32 to vector<8x128xf32>
    %24 = arith.maximumf %22, %23 : vector<8x128xf32>
    %25 = arith.truncf %24 : vector<8x128xf32> to vector<8x128xbf16>
    %c0_10 = arith.constant 0 : index
    %c0_11 = arith.constant 0 : index
    %26 = vector.load %arg6[%c0_10, %c0_11] : memref<128x128xbf16, #tpu.memory_space<vmem>>, vector<128x128xbf16>
    %cst_12 = arith.constant dense<0.000000e+00> : vector<8x128xf32>
    %27 = tpu.matmul %25, %26, %cst_12 {dimension_numbers = #tpu.dot_dimension_numbers<[1], [0], [0], [1], [0, 0, 1, 1], [], []>} : vector<8x128xbf16>, vector<128x128xbf16>, vector<8x128xf32> -> vector<8x128xf32>
    %c0_13 = arith.constant 0 : index
    %c0_14 = arith.constant 0 : index
    %28 = vector.load %arg7[%c0_13, %c0_14] : memref<1x128xf32, #tpu.memory_space<vmem>>, vector<1x128xf32>
    %29 = vector.broadcast %28 : vector<1x128xf32> to vector<8x128xf32>
    %30 = arith.addf %27, %29 : vector<8x128xf32>
    %cst_15 = arith.constant 0.000000e+00 : f32
    %31 = vector.broadcast %cst_15 : f32 to vector<8x128xf32>
    %32 = arith.maximumf %30, %31 : vector<8x128xf32>
    %33 = arith.truncf %32 : vector<8x128xf32> to vector<8x128xbf16>
    %c0_16 = arith.constant 0 : index
    %c0_17 = arith.constant 0 : index
    %34 = vector.load %arg8[%c0_16, %c0_17] : memref<128x8xbf16, #tpu.memory_space<vmem>>, vector<128x8xbf16>
    %cst_18 = arith.constant dense<0.000000e+00> : vector<8x8xf32>
    %35 = tpu.matmul %33, %34, %cst_18 {dimension_numbers = #tpu.dot_dimension_numbers<[1], [0], [0], [1], [0, 0, 1, 1], [], []>} : vector<8x128xbf16>, vector<128x8xbf16>, vector<8x8xf32> -> vector<8x8xf32>
    %c0_19 = arith.constant 0 : index
    %c0_20 = arith.constant 0 : index
    %36 = vector.load %arg9[%c0_19, %c0_20] : memref<1x8xf32, #tpu.memory_space<vmem>>, vector<1x8xf32>
    %37 = vector.broadcast %36 : vector<1x8xf32> to vector<8x8xf32>
    %38 = arith.addf %35, %37 : vector<8x8xf32>
    %cst_21 = arith.constant dense<0xFF800000> : vector<8xf32>
    %39 = vector.multi_reduction <maximumf>, %38, %cst_21 [1] : vector<8x8xf32> to vector<8xf32>
    %40 = vector.shape_cast %39 : vector<8xf32> to vector<8x1xf32>
    %41 = vector.broadcast %40 : vector<8x1xf32> to vector<8x8xf32>
    %42 = arith.subf %38, %41 : vector<8x8xf32>
    %43 = math.exp %42 : vector<8x8xf32>
    %cst_22 = arith.constant dense<0.000000e+00> : vector<8xf32>
    %44 = vector.multi_reduction <add>, %43, %cst_22 [1] : vector<8x8xf32> to vector<8xf32>
    %45 = vector.shape_cast %44 : vector<8xf32> to vector<8x1xf32>
    %46 = tpu.reciprocal %45 {approx = true} : vector<8x1xf32> -> vector<8x1xf32>
    %47 = arith.mulf %45, %46 : vector<8x1xf32>
    %cst_23 = arith.constant 2.000000e+00 : f32
    %48 = vector.broadcast %cst_23 : f32 to vector<8x1xf32>
    %49 = arith.subf %48, %47 : vector<8x1xf32>
    %50 = arith.mulf %46, %49 : vector<8x1xf32>
    %51 = vector.broadcast %50 : vector<8x1xf32> to vector<8x8xf32>
    %52 = arith.mulf %43, %51 : vector<8x8xf32>
    %c0_24 = arith.constant 0 : index
    %c0_25 = arith.constant 0 : index
    %53 = vector.load %arg10[%c0_24, %c0_25] : memref<8x8xf32, #tpu.memory_space<vmem>>, vector<8x8xf32>
    tpu.vector_store %arg10[%c0_24, %c0_25], %52 {strides = array<i32>} : memref<8x8xf32, #tpu.memory_space<vmem>>, vector<8x8xf32>,
    return
  }
  func.func @transform_0(%arg0: i32) -> (i32, i32) {
    %c0_i32 = arith.constant 0 : i32
    %c0_i32_0 = arith.constant 0 : i32
    return %arg0, %c0_i32 : i32, i32
  }
  func.func @transform_1(%arg0: i32) -> (i32, i32) {
    %c0_i32 = arith.constant 0 : i32
    %c0_i32_0 = arith.constant 0 : i32
    %c0_i32_1 = arith.constant 0 : i32
    return %c0_i32, %c0_i32_0 : i32, i32
  }
  func.func @transform_2(%arg0: i32) -> (i32, i32) {
    %c0_i32 = arith.constant 0 : i32
    %c0_i32_0 = arith.constant 0 : i32
    %c0_i32_1 = arith.constant 0 : i32
    return %c0_i32, %c0_i32_0 : i32, i32
  }
  func.func @transform_3(%arg0: i32) -> (i32, i32) {
    %c0_i32 = arith.constant 0 : i32
    %c0_i32_0 = arith.constant 0 : i32
    %c0_i32_1 = arith.constant 0 : i32
    return %c0_i32, %c0_i32_0 : i32, i32
  }
  func.func @transform_4(%arg0: i32) -> (i32, i32) {
    %c0_i32 = arith.constant 0 : i32
    %c0_i32_0 = arith.constant 0 : i32
    %c0_i32_1 = arith.constant 0 : i32
    return %c0_i32, %c0_i32_0 : i32, i32
  }
  func.func @transform_5(%arg0: i32) -> (i32, i32) {
    %c0_i32 = arith.constant 0 : i32
    %c0_i32_0 = arith.constant 0 : i32
    %c0_i32_1 = arith.constant 0 : i32
    return %c0_i32, %c0_i32_0 : i32, i32
  }
  func.func @transform_6(%arg0: i32) -> (i32, i32) {
    %c0_i32 = arith.constant 0 : i32
    %c0_i32_0 = arith.constant 0 : i32
    %c0_i32_1 = arith.constant 0 : i32
    return %c0_i32, %c0_i32_0 : i32, i32
  }
  func.func @transform_7(%arg0: i32) -> (i32, i32) {
    %c0_i32 = arith.constant 0 : i32
    %c0_i32_0 = arith.constant 0 : i32
    %c0_i32_1 = arith.constant 0 : i32
    return %c0_i32, %c0_i32_0 : i32, i32
  }
  func.func @transform_8(%arg0: i32) -> (i32, i32) {
    %c0_i32 = arith.constant 0 : i32
    %c0_i32_0 = arith.constant 0 : i32
    %c0_i32_1 = arith.constant 0 : i32
    return %c0_i32, %c0_i32_0 : i32, i32
  }
  func.func @transform_9(%arg0: i32) -> (i32, i32) {
    %c0_i32 = arith.constant 0 : i32
    %c0_i32_0 = arith.constant 0 : i32
    return %arg0, %c0_i32 : i32, i32
  }
}

</mosaic_0001>

<llo_original>
// kernel: tpu_custom_call.1
$region0: #{tpu_custom_call.1}
  #allocation0 [shape = 'u32[]', space=smem, size = 0x4, offset = 0x4, fixed_abs, tag = 'smem constant byte address 0x4 - core index']
  #allocation1 [shape = 'u32[72,128]{1,0:T(1,128)}', space=vmem, size = 0x9000, scoped, tag = 'internal scratch']
  %s0 = inlined_call_operand.vmem [shape: f32[8,2], index: 0, kind: input, shape index: {}]
  %s1 = inlined_call_operand.vmem [shape: f32[2,64], index: 1, kind: input, shape index: {}]
  %s2 = inlined_call_operand.vmem [shape: f32[1,64], index: 2, kind: input, shape index: {}]
  %s3 = inlined_call_operand.hbm [shape: bf16[64,128], index: 3, kind: input, shape index: {}]
  %s4 = inlined_call_operand.vmem [shape: f32[1,128], index: 4, kind: input, shape index: {}]
  %s5 = inlined_call_operand.vmem [shape: bf16[128,128], index: 5, kind: input, shape index: {}]
  %s6 = inlined_call_operand.vmem [shape: f32[1,128], index: 6, kind: input, shape index: {}]
  %s7 = inlined_call_operand.vmem [shape: bf16[128,8], index: 7, kind: input, shape index: {}]
  %s8 = inlined_call_operand.vmem [shape: f32[1,8], index: 8, kind: input, shape index: {}]
  %s9 = inlined_call_operand.hbm [shape: f32[8,8], index: 9, kind: output, shape index: {}]
  %s10 = sld [smem:[#allocation0]]
  $region50: #{tpu_custom_call.1} parent=0
    _
  %s12 = ssub.s32 1, %s10
  %s13 = scalar_select 0, %s12, %s10
  $region1: #{tpu_custom_call.1} parent=0
    #allocation2 [shape = 'u8[16384]{0}', space=vmem, size = 0x4000, scoped, tag = 'input window, operand 3, single buffered']
    #allocation3 [shape = 's32[1]{0}', space=sflag, size = 0x4, scoped, tag = 'scoped memory for tpu_custom_call.1']
    #allocation4 [shape = 's32[1]{0}', space=sflag, size = 0x4, scoped, tag = 'scoped memory for tpu_custom_call.1']
    #allocation5 [shape = 'u8[4096]{0}', space=vmem, size = 0x1000, scoped, tag = 'output window, operand 0, single buffered']
    %14 = vsyncpa [#allocation3], 0
    %15 = vsyncpa [#allocation4], 0
    // Predicated region
    $region2: #{tpu_custom_call.1} parent=1 // pred_check
      _
    $region3: #{tpu_custom_call.1} parent=1 // pred_check_branch
      %17 = sbr.rel (0) target = $region5
    $region4: #{tpu_custom_call.1} parent=1 // pred_region
      _
    $region5: #{tpu_custom_call.1} parent=1 // pred_fallthru
      _
    // Predicated region
    $region6: #{tpu_custom_call.1} parent=1 // pred_check
      _
    $region7: #{tpu_custom_call.1} parent=1 // pred_check_branch
      %19 = sbr.rel (0) target = $region9
    $region8: #{tpu_custom_call.1} parent=1 // pred_region
      _
    $region9: #{tpu_custom_call.1} parent=1 // pred_fallthru
      _
    // Predicated region
    $region10: #{tpu_custom_call.1} parent=1 // pred_check
      _
    $region11: #{tpu_custom_call.1} parent=1 // pred_check_branch
      %21 = sbr.rel (0) target = $region13
    $region12: #{tpu_custom_call.1} parent=1 // pred_region
      _
    $region13: #{tpu_custom_call.1} parent=1 // pred_fallthru
      _
    // Predicated region
    $region14: #{tpu_custom_call.1} parent=1 // pred_check
      _
    $region15: #{tpu_custom_call.1} parent=1 // pred_check_branch
      %23 = sbr.rel (0) target = $region17
    $region16: #{tpu_custom_call.1} parent=1 // pred_region
      %25 = vsyncadd [#allocation3], 0
      %s26 = sshll.u32 %s3, 4
      %s27 = int_to_ptr.hbm [resolvable:$true] %s26
      %s28 = sshll.u32 [#allocation2], 4
      %s29 = int_to_ptr.vmem [resolvable:$true] %s28
      %34 = dma.hbm_to_vmem [thread:$0]  %s27, 512, %s29, [#allocation3], 64, 64, 4
    $region17: #{tpu_custom_call.1} parent=1 // pred_fallthru
      _
    // Predicated region
    $region18: #{tpu_custom_call.1} parent=1 // pred_check
      _
    $region19: #{tpu_custom_call.1} parent=1 // pred_check_branch
      %36 = sbr.rel (0) target = $region21
    $region20: #{tpu_custom_call.1} parent=1 // pred_region
      _
    $region21: #{tpu_custom_call.1} parent=1 // pred_fallthru
      _
    // Predicated region
    $region22: #{tpu_custom_call.1} parent=1 // pred_check
      _
    $region23: #{tpu_custom_call.1} parent=1 // pred_check_branch
      %38 = sbr.rel (0) target = $region25
    $region24: #{tpu_custom_call.1} parent=1 // pred_region
      _
    $region25: #{tpu_custom_call.1} parent=1 // pred_fallthru
      _
    // Predicated region
    $region26: #{tpu_custom_call.1} parent=1 // pred_check
      _
    $region27: #{tpu_custom_call.1} parent=1 // pred_check_branch
      %40 = sbr.rel (0) target = $region29
    $region28: #{tpu_custom_call.1} parent=1 // pred_region
      _
    $region29: #{tpu_custom_call.1} parent=1 // pred_fallthru
      _
    // Predicated region
    $region30: #{tpu_custom_call.1} parent=1 // pred_check
      _
    $region31: #{tpu_custom_call.1} parent=1 // pred_check_branch
      %42 = sbr.rel (0) target = $region33
    $region32: #{tpu_custom_call.1} parent=1 // pred_region
      _
    $region33: #{tpu_custom_call.1} parent=1 // pred_fallthru
      _
    // Predicated region
    $region34: #{tpu_custom_call.1} parent=1 // pred_check
      _
    $region35: #{tpu_custom_call.1} parent=1 // pred_check_branch
      %44 = sbr.rel (0) target = $region37
    $region36: #{tpu_custom_call.1} parent=1 // pred_region
      _
    $region37: #{tpu_custom_call.1} parent=1 // pred_fallthru
      _
    // Predicated region
    $region38: #{tpu_custom_call.1} parent=1 // pred_check
      _
    $region39: #{tpu_custom_call.1} parent=1 // pred_check_branch
      %46 = sbr.rel (0) target = $region41
    $region40: #{tpu_custom_call.1} parent=1 // pred_region
      %48 = dma.done [#allocation3], 512
    $region41: #{tpu_custom_call.1} parent=1 // pred_fallthru
      _
    %v50 = vld [vmem:[%s0] sm:$0xff]
    %v51 = vld [vmem:[%s1] sm:$0x3]
    %v52 = vld [vmem:[%s2] sm:$0x1]
    %54 = vset.pattern.permute.xlu0 0
    %55 = vperm.xlu0 %54, %v50
    %v56 = vpop.permute.xlu0 %55
    %v58 = vperm.slane %v51, 0
    %v59 = vmul.f32 %v56, %v58
    %v61 = vperm.slane %v52, 0
    %v63 = vadd.f32 %v61, %v59
    %64 = vset.pattern.permute.xlu0 1
    %65 = vperm.xlu0 %64, %v50
    %v66 = vpop.permute.xlu0 %65
    %v68 = vperm.slane %v51, 1
    %v69 = vmul.f32 %v66, %v68
    %v70 = vadd.f32 %v63, %v69
    %v71 = vand.u32 2147483647, %v70
    %vm72 = vcmp.le.f32.partialorder %v71, 0.7853982
    %vm73 = vcmp.lt.s32.totalorder %v70, 0
    %v74 = vand.u32 %v70, 2139095040
    %v75 = vshrl.u32 %v74, 23
    %v76 = vsub.s32 %v75, 127
    %v77 = vand.u32 2147483647, %v70
    %v78 = vand.u32 %v77, 8388607
    %v79 = vor.u32 %v78, 8388608
    %v80 = vsub.s32 0, %v79
    %v81 = vadd.s32 %v76, 1
    %vm82 = vcmp.gt.s32.totalorder %v81, 0
    %v83 = vsel %vm82, %v81, 0
    %v84 = vshrl.u32 %v83, 5
    %v85 = vand.u32 %v83, 31
    %v86 = vsub.s32 32, %v85
    %v87 = vshrl.u32 683565275, %v86
    %v88 = vshll.u32 683565275, %v85
    %v89 = vshrl.u32 2475754826, %v86
    %v90 = vor.u32 %v88, %v89
    %v91 = vshll.u32 2475754826, %v85
    %v92 = vshrl.u32 2131351028, %v86
    %v93 = vor.u32 %v91, %v92
    %v94 = vshll.u32 2131351028, %v85
    %v95 = vshrl.u32 2102212464, %v86
    %v96 = vor.u32 %v94, %v95
    %v97 = vshll.u32 2102212464, %v85
    %v98 = vshrl.u32 920167782, %v86
    %v99 = vor.u32 %v97, %v98
    %v100 = vshll.u32 920167782, %v85
    %v101 = vshrl.u32 1326507024, %v86
    %v102 = vor.u32 %v100, %v101
    %vm103 = vcmp.lt.s32.totalorder %v84, 1
    %vm104 = vcmp.lt.s32.totalorder %v84, 2
    %vm105 = vcmp.lt.s32.totalorder %v84, 3
    %vm106 = vcmp.lt.s32.totalorder %v84, 4
    %v107 = vsel %vm103, %v87, %v90
    %v108 = vsel %vm106, %v96, 2102212464
    %v109 = vsel %vm105, %v93, %v108
    %v110 = vsel %vm104, %v107, %v109
    %v111 = vsel %vm103, %v90, %v93
    %v112 = vsel %vm106, %v99, 920167782
    %v113 = vsel %vm105, %v96, %v112
    %v114 = vsel %vm104, %v111, %v113
    %v115 = vsel %vm103, %v93, %v96
    %v116 = vsel %vm106, %v102, 1326507024
    %v117 = vsel %vm105, %v99, %v116
    %v118 = vsel %vm104, %v115, %v117
    %v119 = vshll.u32 %v79, 8
    %v120 = vand.u32 %v119, 65535
    %v121 = vshrl.u32 %v119, 16
    %v122 = vand.u32 %v118, 65535
    %v123 = vshrl.u32 %v118, 16
    %v124 = vmul.u32 %v120, %v122
    %v125 = vmul.u32 %v120, %v123
    %v126 = vmul.u32 %v121, %v122
    %v127 = vmul.u32 %v121, %v123
    %v128 = vshll.u32 %v125, 16
    %v129 = vshrl.u32 %v125, 16
    %v130 = vshll.u32 %v126, 16
    %v131 = vshrl.u32 %v126, 16
    %vm132 = vc.u32 %v124, %v128
    %v133 = vsel %vm132, 1, 0
    %v134 = vadd.s32 %v124, %v128
    %v135 = vadd.s32 %v127, %v133
    %vm136 = vc.u32 %v134, %v130
    %v137 = vsel %vm136, 1, 0
    %v138 = vadd.s32 %v134, %v130
    %v139 = vadd.s32 %v135, %v137
    %v140 = vadd.s32 %v139, %v129
    %v141 = vadd.s32 %v140, %v131
    %v142 = vand.u32 %v119, 65535
    %v143 = vshrl.u32 %v119, 16
    %v144 = vand.u32 %v114, 65535
    %v145 = vshrl.u32 %v114, 16
    %v146 = vmul.u32 %v142, %v144
    %v147 = vmul.u32 %v142, %v145
    %v148 = vmul.u32 %v143, %v144
    %v149 = vmul.u32 %v143, %v145
    %v150 = vshll.u32 %v147, 16
    %v151 = vshrl.u32 %v147, 16
    %v152 = vshll.u32 %v148, 16
    %v153 = vshrl.u32 %v148, 16
    %vm154 = vc.u32 %v146, %v150
    %v155 = vsel %vm154, 1, 0
    %v156 = vadd.s32 %v146, %v150
    %v157 = vadd.s32 %v149, %v155
    %vm158 = vc.u32 %v156, %v152
    %v159 = vsel %vm158, 1, 0
    %v160 = vadd.s32 %v156, %v152
    %v161 = vadd.s32 %v157, %v159
    %v162 = vadd.s32 %v161, %v151
    %v163 = vadd.s32 %v162, %v153
    %v164 = vmul.u32 %v119, %v110
    %v165 = vadd.s32 %v141, %v160
    %vm166 = vc.u32 %v141, %v160
    %v167 = vadd.s32 %v163, 1
    %v168 = vsel %vm166, %v167, %v163
    %v169 = vadd.s32 %v164, %v168
    %v170 = vadd.s32 %v169, 536870912
    %v171 = vshrl.u32 %v170, 30
    %v172 = vshll.u32 %v171, 30
    %v173 = vsub.s32 %v169, %v172
    %vm174 = vcmp.lt.s32.totalorder %v173, 0
    %v175 = vsub.s32 0, %v173
    %v176 = vsel %vm174, %v175, %v173
    %v177 = vclz %v176
    %v178 = vsub.s32 %v177, 2
    %vm179 = vcmp.gt.s32.totalorder 0, %v178
    %v180 = vsel %vm179, 0, %v178
    %v181 = vsub.s32 32, %v180
    %v182 = vshll.u32 %v173, %v180
    %v183 = vshrl.u32 %v165, %v181
    %v184 = vor.u32 %v182, %v183
    %v185 = vsub.s32 4294967266, %v180
    %v186 = vadd.s32 %v185, 127
    %v187 = vshll.u32 %v186, 23
    %v188 = vor.u32 4788187, %v187
    %v189 = vand.u32 2147483647, %v188
    %v191 = vcvt.s32.f32 %v184
    %v192 = vmul.f32 %v191, %v189
    %v193 = vxor.u32 %v192, 2147483648
    %v194 = vsel %vm73, %v193, %v192
    %v195 = vsub.s32 4, %v171
    %v196 = vsel %vm73, %v195, %v171
    %v197 = vsel %vm72, %v70, %v194
    %v198 = vsel %vm72, 0, %v196
    %v199 = vmul.f32 %v197, %v197
    %v200 = vmul.f32 %v199, -0.001358992
    %v201 = vadd.f32 %v200, 0.041655596
    %v202 = vmul.f32 %v199, %v201
    %v203 = vadd.f32 %v202, -0.4999988
    %v204 = vmul.f32 %v199, %v203
    %v205 = vadd.f32 1.0, %v204
    %v206 = vmul.f32 %v197, %v197
    %v207 = vmul.f32 %v206, -0.00019511016
    %v208 = vadd.f32 %v207, 0.008332121
    %v209 = vmul.f32 %v206, %v208
    %v210 = vadd.f32 %v209, -0.16666654
    %v211 = vmul.f32 %v206, %v210
    %v212 = vadd.f32 %v211, 1.0
    %v213 = vmul.f32 %v212, %v197
    %vm214 = vweird.f32 %v70
    %v215 = vadd.s32 %v198, 3
    %v216 = vand.u32 %v215, 3
    %vm217 = vcmp.lt.s32.totalorder %v216, 2
    %vm218 = vcmp.eq.s32.totalorder %v216, 0
    %v219 = vxor.u32 %v213, 2147483648
    %v220 = vsel %vm218, %v205, %v219
    %vm221 = vcmp.eq.s32.totalorder %v216, 2
    %v222 = vxor.u32 %v205, 2147483648
    %v223 = vsel %vm221, %v222, %v213
    %v224 = vsel %vm217, %v220, %v223
    %v225 = vsel %vm214, nan, %v224
    %v226 = vpack.c.bf16 %v225, %v225
    %v227 = vld [vmem:[#allocation2] sm:$0xf]
    %v228 = vld [vmem:[#allocation2 + $0x4] sm:$0xf]
    %v229 = vld [vmem:[#allocation2 + $0x8] sm:$0xf]
    %v230 = vld [vmem:[#allocation2 + $0xc] sm:$0xf]
    %v231 = vld [vmem:[#allocation2 + $0x10] sm:$0xf]
    %v232 = vld [vmem:[#allocation2 + $0x14] sm:$0xf]
    %v233 = vld [vmem:[#allocation2 + $0x18] sm:$0xf]
    %v234 = vld [vmem:[#allocation2 + $0x1c] sm:$0xf]
    %v235 = vld [vmem:[%s4] sm:$0x1]
    %v237 = vperm.slane %v235, 0
    %v247 = vunpack.c.l.b16 %v227
    %v248 = vunpack.c.l.b16 %v228
    %v249 = vunpack.c.l.b16 %v229
    %v250 = vunpack.c.l.b16 %v230
    %v251 = vunpack.c.l.b16 %v231
    %v252 = vunpack.c.l.b16 %v232
    %v253 = vunpack.c.l.b16 %v233
    %v254 = vunpack.c.l.b16 %v234
    %v255 = vpack.c.b16 %v248, %v247
    %v256 = vpack.c.b16 %v250, %v249
    %v257 = vpack.c.b16 %v252, %v251
    %v258 = vpack.c.b16 %v254, %v253
    %vm263 = vcmask 523264
    %v265 = vsel %vm263, %v226, 0
    %267 = vmatpush.bf16.msra.mxu0 0
    %268 = vmatpush.bf16.msra.mxu0 0
    %269 = vmatpush.bf16.msra.mxu0 0
    %270 = vmatpush.bf16.msra.mxu0 0
    %271 = vmatpush.bf16.msra.mxu0 %v258
    %272 = vmatpush.bf16.msra.mxu0 %v257
    %273 = vmatpush.bf16.msra.mxu0 %v256
    %274 = vmatpush.bf16.msra.mxu0 %v255
    %275 = vmatmul.bf16.gmra.mxu0 %v265
    %v276 = vpop.f32.mrf.mxu0
    %v277 = vadd.f32 %v237, %v276
    %v278 = vpop.f32.mrf.mxu0
    %279 = vdwg.mxu0
    %v280 = vmax.f32 %v277, 0.0
    %v281 = vpack.c.bf16 %v280, %v280
    %v282 = vld [vmem:[%s5] sm:$0xf]
    %v283 = vld [vmem:[%s5 + $0x4] sm:$0xf]
    %v284 = vld [vmem:[%s5 + $0x8] sm:$0xf]
    %v285 = vld [vmem:[%s5 + $0xc] sm:$0xf]
    %v286 = vld [vmem:[%s5 + $0x10] sm:$0xf]
    %v287 = vld [vmem:[%s5 + $0x14] sm:$0xf]
    %v288 = vld [vmem:[%s5 + $0x18] sm:$0xf]
    %v289 = vld [vmem:[%s5 + $0x1c] sm:$0xf]
    %v290 = vld [vmem:[%s5 + $0x20] sm:$0xf]
    %v291 = vld [vmem:[%s5 + $0x24] sm:$0xf]
    %v292 = vld [vmem:[%s5 + $0x28] sm:$0xf]
    %v293 = vld [vmem:[%s5 + $0x2c] sm:$0xf]
    %v294 = vld [vmem:[%s5 + $0x30] sm:$0xf]
    %v295 = vld [vmem:[%s5 + $0x34] sm:$0xf]
    %v296 = vld [vmem:[%s5 + $0x38] sm:$0xf]
    %v297 = vld [vmem:[%s5 + $0x3c] sm:$0xf]
    %v298 = vld [vmem:[%s6] sm:$0x1]
    %v300 = vperm.slane %v298, 0
    %v318 = vunpack.c.l.b16 %v282
    %v319 = vunpack.c.l.b16 %v283
    %v320 = vunpack.c.l.b16 %v284
    %v321 = vunpack.c.l.b16 %v285
    %v322 = vunpack.c.l.b16 %v286
    %v323 = vunpack.c.l.b16 %v287
    %v324 = vunpack.c.l.b16 %v288
    %v325 = vunpack.c.l.b16 %v289
    %v326 = vunpack.c.l.b16 %v290
    %v327 = vunpack.c.l.b16 %v291
    %v328 = vunpack.c.l.b16 %v292
    %v329 = vunpack.c.l.b16 %v293
    %v330 = vunpack.c.l.b16 %v294
    %v331 = vunpack.c.l.b16 %v295
    %v332 = vunpack.c.l.b16 %v296
    %v333 = vunpack.c.l.b16 %v297
    %v334 = vpack.c.b16 %v319, %v318
    %v335 = vpack.c.b16 %v321, %v320
    %v336 = vpack.c.b16 %v323, %v322
    %v337 = vpack.c.b16 %v325, %v324
    %v338 = vpack.c.b16 %v327, %v326
    %v339 = vpack.c.b16 %v329, %v328
    %v340 = vpack.c.b16 %v331, %v330
    %v341 = vpack.c.b16 %v333, %v332
    %350 = vmatpush.bf16.msra.mxu0 %v341
    %351 = vmatpush.bf16.msra.mxu0 %v340
    %352 = vmatpush.bf16.msra.mxu0 %v339
    %353 = vmatpush.bf16.msra.mxu0 %v338
    %354 = vmatpush.bf16.msra.mxu0 %v337
    %355 = vmatpush.bf16.msra.mxu0 %v336
    %356 = vmatpush.bf16.msra.mxu0 %v335
    %357 = vmatpush.bf16.msra.mxu0 %v334
    %358 = vmatmul.bf16.gmra.mxu0 %v281
    %v359 = vpop.f32.mrf.mxu0
    %v360 = vadd.f32 %v300, %v359
    %v361 = vpop.f32.mrf.mxu0
    %362 = vdwg.mxu0
    %v363 = vmax.f32 %v360, 0.0
    %v364 = vpack.c.bf16 %v363, %v363
    %v365 = vld [vmem:[%s7] sm:$0xf]
    %v366 = vld [vmem:[%s7 + $0x4] sm:$0xf]
    %v367 = vld [vmem:[%s7 + $0x8] sm:$0xf]
    %v368 = vld [vmem:[%s7 + $0xc] sm:$0xf]
    %v369 = vld [vmem:[%s7 + $0x10] sm:$0xf]
    %v370 = vld [vmem:[%s7 + $0x14] sm:$0xf]
    %v371 = vld [vmem:[%s7 + $0x18] sm:$0xf]
    %v372 = vld [vmem:[%s7 + $0x1c] sm:$0xf]
    %v373 = vld [vmem:[%s7 + $0x20] sm:$0xf]
    %v374 = vld [vmem:[%s7 + $0x24] sm:$0xf]
    %v375 = vld [vmem:[%s7 + $0x28] sm:$0xf]
    %v376 = vld [vmem:[%s7 + $0x2c] sm:$0xf]
    %v377 = vld [vmem:[%s7 + $0x30] sm:$0xf]
    %v378 = vld [vmem:[%s7 + $0x34] sm:$0xf]
    %v379 = vld [vmem:[%s7 + $0x38] sm:$0xf]
    %v380 = vld [vmem:[%s7 + $0x3c] sm:$0xf]
    %v381 = vld [vmem:[%s8] sm:$0x1]
    %v383 = vperm.slane %v381, 0
    %v401 = vunpack.c.l.b16 %v365
    %v402 = vunpack.c.l.b16 %v366
    %v403 = vunpack.c.l.b16 %v367
    %v404 = vunpack.c.l.b16 %v368
    %v405 = vunpack.c.l.b16 %v369
    %v406 = vunpack.c.l.b16 %v370
    %v407 = vunpack.c.l.b16 %v371
    %v408 = vunpack.c.l.b16 %v372
    %v409 = vunpack.c.l.b16 %v373
    %v410 = vunpack.c.l.b16 %v374
    %v411 = vunpack.c.l.b16 %v375
    %v412 = vunpack.c.l.b16 %v376
    %v413 = vunpack.c.l.b16 %v377
    %v414 = vunpack.c.l.b16 %v378
    %v415 = vunpack.c.l.b16 %v379
    %v416 = vunpack.c.l.b16 %v380
    %v417 = vpack.c.b16 %v402, %v401
    %v418 = vpack.c.b16 %v404, %v403
    %v419 = vpack.c.b16 %v406, %v405
    %v420 = vpack.c.b16 %v408, %v407
    %v421 = vpack.c.b16 %v410, %v409
    %v422 = vpack.c.b16 %v412, %v411
    %v423 = vpack.c.b16 %v414, %v413
    %v424 = vpack.c.b16 %v416, %v415
    %433 = vmatpush.bf16.msra.mxu0 %v424
    %434 = vmatpush.bf16.msra.mxu0 %v423
    %435 = vmatpush.bf16.msra.mxu0 %v422
    %436 = vmatpush.bf16.msra.mxu0 %v421
    %437 = vmatpush.bf16.msra.mxu0 %v420
    %438 = vmatpush.bf16.msra.mxu0 %v419
    %439 = vmatpush.bf16.msra.mxu0 %v418
    %440 = vmatpush.bf16.msra.mxu0 %v417
    %441 = vmatmul.bf16.gmra.mxu0 %v364
    %v442 = vpop.f32.mrf.mxu0
    %v443 = vadd.f32 %v383, %v442
    %v444 = vpop.f32.mrf.mxu0
    %445 = vdwg.mxu0
    %vm446 = vcmask 64512
    %v447 = vsel %vm446, %v443, -inf
    %448 = vmax.xlane.f32.xlu0 %v447
    %v449 = vpop.xlane.xlu0 %448
    %v450 = vsub.f32 %v443, %v449
    %v451 = vmul.f32 %v450, 1.442695
    %v452 = vpow.pop %v451
    %v453 = vsel %vm446, %v452, 0.0
    %454 = vadd.xlane.f32.xlu0 %v453
    %v455 = vpop.xlane.xlu0 %454
    %v456 = vrcp.pop %v455
    %v457 = vmul.f32 %v455, %v456
    %v458 = vsub.f32 2.0, %v457
    %v459 = vmul.f32 %v456, %v458
    %v460 = vmul.f32 %v452, %v459
    %461 = vst.msk [vmem:[#allocation5] sm:$0xff] %vm446, %v460
    // Predicated region
    $region42: #{tpu_custom_call.1} parent=1 // pred_check
      _
    $region43: #{tpu_custom_call.1} parent=1 // pred_check_branch
      %463 = sbr.rel (0) target = $region45
    $region44: #{tpu_custom_call.1} parent=1 // pred_region
      %465 = vsyncadd [#allocation4], 0
      %s467 = sshll.u32 [#allocation5], 4
      %s468 = int_to_ptr.vmem [resolvable:$true] %s467
      %s469 = sshll.u32 %s9, 4
      %s470 = int_to_ptr.hbm [resolvable:$true] %s469
      %472 = dma.vmem_to_hbm [thread:$0]  %s468, 128, %s470, [#allocation4]
    $region45: #{tpu_custom_call.1} parent=1 // pred_fallthru
      _
    // Predicated region
    $region46: #{tpu_custom_call.1} parent=1 // pred_check
      _
    $region47: #{tpu_custom_call.1} parent=1 // pred_check_branch
      %474 = sbr.rel (0) target = $region49
    $region48: #{tpu_custom_call.1} parent=1 // pred_region
      %476 = dma.done [#allocation4], 128
    $region49: #{tpu_custom_call.1} parent=1 // pred_fallthru
      _
    %477 = vsyncpa [#allocation3], 1
    %478 = vsyncpa [#allocation4], 1

</llo_original>
